<compile_context>
chip_gen: v7x
topology: tpu7x:2x2x1
jax: 0.10.0
libtpu: 0.0.40
codegen_flags: <defaults>
</compile_context>

<pallas_src>
import numpy as np
import jax
import jax.numpy as jnp
from jax.experimental import pallas as pl
from jax.experimental.pallas import tpu as pltpu

NEG_SLOPE = 0.01  # PyTorch F.leaky_relu default


def _leaky(x):
    return jnp.where(x >= 0, x, NEG_SLOPE * x)


def _round_up(n, m):
    return (n + m - 1) // m * m


def _cdiv(a, b):
    return (a + b - 1) // b


# ---------------------------------------------------------------------------
# Kernel: one batch tile -> conv(as MXU matmul) -> 3 dense layers, lane-dense.
# ---------------------------------------------------------------------------
def mainnet_kernel(x_ref, wc_ref, bc_ref, w2_ref, b2_ref, w3_ref, b3_ref,
                   w4_ref, b4_ref, o_ref):
    x = x_ref[...]                                            # (TM, L) f32

    # Conv1d(1->6,k=3) + flatten: x @ Wc.  Wc holds the 3 taps per output
    # column in PyTorch's channel-major flat order (flat = c*Lc + p); the
    # lane-pad columns of Wc / bc are zero, so the padded h columns are zero
    # and hit zero rows of w2.
    h = _leaky(jnp.dot(x, wc_ref[...],
                       preferred_element_type=jnp.float32) + bc_ref[...])

    # Dense chain.  h follows the weight dtype so an optional bf16 weight path
    # is a drop-in; with the default f32 weights astype is a no-op.
    h = _leaky(jnp.dot(h.astype(w2_ref.dtype), w2_ref[...],
                       preferred_element_type=jnp.float32) + b2_ref[...])
    h = _leaky(jnp.dot(h.astype(w3_ref.dtype), w3_ref[...],
                       preferred_element_type=jnp.float32) + b3_ref[...])
    o_ref[...] = (jnp.dot(h.astype(w4_ref.dtype), w4_ref[...],
                          preferred_element_type=jnp.float32)
                  + b4_ref[...]).astype(o_ref.dtype)


# ---------------------------------------------------------------------------
# Tiling / wrapper
# ---------------------------------------------------------------------------
def _choose_batch_tile(B, L, Fp, h2, h3, O, tm_max):
    B8 = _round_up(max(B, 1), 8)
    # Cap TM by an activation-VMEM budget (x/out double-buffered + h stages).
    row_bytes = 4 * (2 * L + Fp + h2 + h3 + 2 * O)
    tm_cap = max(8, ((12 << 20) // row_bytes) // 8 * 8)
    tm_max = max(8, min(tm_max, tm_cap))
    nb = _cdiv(B8, tm_max)
    if B8 >= 16:
        nb = max(nb, 2)            # >=2 grid steps so v7x uses both TCs
    TM = _round_up(_cdiv(B8, nb), 8)
    nb = _cdiv(B8, TM)
    return TM, nb, TM * nb


def mainnet_forward(x, kernel_params, tm_max=512):
    wc, bc, w2, b2, w3, b3, w4, b4 = kernel_params
    B, L = x.shape
    Fp, h2, h3, O = wc.shape[1], w2.shape[1], w3.shape[1], w4.shape[1]

    TM, nb, Bp = _choose_batch_tile(B, L, Fp, h2, h3, O, tm_max)
    if Bp != B:
        x = jnp.pad(x, ((0, Bp - B), (0, 0)))

    # VMEM budget from actual buffer counts: single-buffered resident weights,
    # double-buffered x/out tiles, headroom for in-flight activations.
    nbytes = lambda a: int(a.size) * a.dtype.itemsize
    weight_bytes = sum(nbytes(a) for a in (wc, bc, w2, b2, w3, b3, w4, b4))
    act_bytes = 4 * TM * (2 * L + Fp + h2 + h3 + 2 * O)
    needed = weight_bytes + act_bytes
    try:
        vmem_cap = pltpu.get_tpu_info().vmem_capacity_bytes
    except Exception:
        vmem_cap = 64 << 20                      # conservative (v7x per-core)
    soft_cap = int(0.6 * vmem_cap)               # ~38 MiB v7x, ~76 MiB v5e/v6e
    vmem_limit = min(max(16 << 20, int(1.25 * needed) + (2 << 20)), soft_cap)
    if needed + (1 << 20) > vmem_limit:          # never under-provision
        vmem_limit = min(int(1.2 * needed) + (1 << 20), int(0.9 * vmem_cap))

    flops = 2 * Bp * (L * Fp + Fp * h2 + h2 * h3 + h3 * O)
    bytes_accessed = 4 * (Bp * L + Bp * O) + weight_bytes

    resident = pl.BlockSpec(memory_space=pltpu.MemorySpace.VMEM)
    out = pl.pallas_call(
        mainnet_kernel,
        out_shape=jax.ShapeDtypeStruct((Bp, O), jnp.float32),
        grid=(nb,),
        in_specs=[
            pl.BlockSpec((TM, L), lambda i: (i, 0)),  # x: batch-tiled, pipelined
            resident,                                  # wc (L, Fp)
            resident,                                  # bc (1, Fp)
            resident,                                  # w2 (Fp, h2)
            resident,                                  # b2 (1, h2)
            resident,                                  # w3 (h2, h3)
            resident,                                  # b3 (1, h3)
            resident,                                  # w4 (h3, O) unpadded
            resident,                                  # b4 (1, O)
        ],
        out_specs=pl.BlockSpec((TM, O), lambda i: (i, 0)),
        compiler_params=pltpu.CompilerParams(
            dimension_semantics=("parallel",),         # 2-TC sharding on v7x
            vmem_limit_bytes=int(vmem_limit)),
        cost_estimate=pl.CostEstimate(flops=int(flops), transcendentals=0,
                                      bytes_accessed=int(bytes_accessed)),
    )(x, wc, bc, w2, b2, w3, b3, w4, b4)

    return out if Bp == B else out[:B]


# ---------------------------------------------------------------------------
# Parameter construction (mirrors MainNet.__init__) + pure-JAX reference
# ---------------------------------------------------------------------------
def _xavier_uniform(key, shape, fan_in, fan_out):
    limit = (6.0 / (fan_in + fan_out)) ** 0.5
    return jax.random.uniform(key, shape, jnp.float32, -limit, limit)


def _bias_init(key, shape, fan_in):
    bound = 1.0 / (fan_in ** 0.5)
    return jax.random.uniform(key, shape, jnp.float32, -bound, bound)


def make_params(key, input_dim, output_dim, matmul_dtype=jnp.float32):
    L = 2 * input_dim            # forward implies sequence length = 2*input_dim
    Lc = L - 2                   # conv output length (kernel 3, stride 1)
    F = 6 * Lc                   # flattened feature size
    Fp = _round_up(F, 128)       # lane-padded feature size

    if input_dim == 10:
        h2, h3 = 128, 128
    elif input_dim == 5:
        h2, h3 = 64, 64
    elif input_dim == 20:
        h2, h3 = 256, 256
    else:
        h2, h3 = 512, 256

    ks = jax.random.split(key, 8)

    # Conv1d(1,6,3): weight (6,1,3), xavier_uniform (fan_in=3, fan_out=18).
    w1 = _xavier_uniform(ks[0], (6, 1, 3), 3, 18)
    b1 = _bias_init(ks[1], (6,), 3)
    # Linear layers in (in, out); xavier_uniform is symmetric in (in, out).
    w2 = _xavier_uniform(ks[2], (F, h2), F, h2)
    b2 = _bias_init(ks[3], (1, h2), F)
    w3 = _xavier_uniform(ks[4], (h2, h3), h2, h3)
    b3 = _bias_init(ks[5], (1, h3), h2)
    w4 = _xavier_uniform(ks[6], (h3, output_dim), h3, output_dim)
    b4 = _bias_init(ks[7], (1, output_dim), h3)

    # Tap-expansion matrix: (x @ wc)[b, c*Lc + p] == sum_k w1[c,0,k]*x[b, p+k].
    wc_np = np.zeros((L, Fp), np.float32)
    w1_np = np.asarray(w1)
    p = np.arange(Lc)
    for c in range(6):
        for k in range(3):
            wc_np[p + k, c * Lc + p] = w1_np[c, 0, k]
    wc = jnp.asarray(wc_np)

    bc = jnp.zeros((1, Fp), jnp.float32).at[0, :F].set(jnp.repeat(b1, Lc))
    w2p = jnp.zeros((Fp, h2), jnp.float32).at[:F, :].set(w2)

    kernel_params = (wc, bc,
                     w2p.astype(matmul_dtype), b2,
                     w3.astype(matmul_dtype), b3,
                     w4.astype(matmul_dtype), b4)
    ref_params = (w1, b1, w2, b2, w3, b3, w4, b4)
    return kernel_params, ref_params


def reference_forward(x, ref_params):
    """Pure-JAX replica of the PyTorch forward for a correctness check."""
    w1, b1, w2, b2, w3, b3, w4, b4 = ref_params
    B, L = x.shape
    Lc = L - 2
    patches = jnp.stack([x[:, k:k + Lc] for k in range(3)], axis=1)   # (B,3,Lc)
    conv = jnp.einsum('ck,bkp->bcp', w1[:, 0, :], patches) + b1[None, :, None]
    h = _leaky(conv).reshape(B, -1)                                   # (B,6*Lc)
    h = _leaky(h @ w2 + b2)
    h = _leaky(h @ w3 + b3)
    return h @ w4 + b4


if __name__ == "__main__":
    input_dim, output_dim, batch = 10, 4, 8
    key = jax.random.PRNGKey(0)
    pkey, xkey = jax.random.split(key)

    kernel_params, ref_params = make_params(pkey, input_dim, output_dim)
    x = jax.random.normal(xkey, (batch, 2 * input_dim), jnp.float32)

    out = jax.block_until_ready(mainnet_forward(x, kernel_params))
    ref = reference_forward(x, ref_params)

    assert out.shape == (batch, output_dim)
    assert jnp.allclose(out, ref, atol=1e-3, rtol=1e-3), "mismatch vs reference"

    print("KERNEL_OK")
</pallas_src>

<mosaic_0001>
module attributes {stable_mosaic.version = 11 : i64} {
  func.func @mainnet_kernel(%arg0: i32, %arg1: memref<8x20xf32, #tpu.memory_space<vmem>>, %arg2: memref<20x128xf32, #tpu.memory_space<vmem>>, %arg3: memref<1x128xf32, #tpu.memory_space<vmem>>, %arg4: memref<128x128xf32, #tpu.memory_space<vmem>>, %arg5: memref<1x128xf32, #tpu.memory_space<vmem>>, %arg6: memref<128x128xf32, #tpu.memory_space<vmem>>, %arg7: memref<1x128xf32, #tpu.memory_space<vmem>>, %arg8: memref<128x4xf32, #tpu.memory_space<vmem>>, %arg9: memref<1x4xf32, #tpu.memory_space<vmem>>, %arg10: memref<8x4xf32, #tpu.memory_space<vmem>>) attributes {dimension_semantics = [#tpu.dimension_semantics<parallel>], iteration_bounds = array<i64: 1>, scalar_prefetch = 0 : i64, scratch_operands = 0 : i64, tpu.core_type = #tpu.core_type<tc>, window_params = [{transform_indices = @transform_0, window_bounds = array<i64: 8, 20>}, {pipeline_mode = #tpu.pipeline_mode<synchronous>, transform_indices = @transform_1, window_bounds = array<i64: 20, 128>}, {pipeline_mode = #tpu.pipeline_mode<synchronous>, transform_indices = @transform_2, window_bounds = array<i64: 1, 128>}, {pipeline_mode = #tpu.pipeline_mode<synchronous>, transform_indices = @transform_3, window_bounds = array<i64: 128, 128>}, {pipeline_mode = #tpu.pipeline_mode<synchronous>, transform_indices = @transform_4, window_bounds = array<i64: 1, 128>}, {pipeline_mode = #tpu.pipeline_mode<synchronous>, transform_indices = @transform_5, window_bounds = array<i64: 128, 128>}, {pipeline_mode = #tpu.pipeline_mode<synchronous>, transform_indices = @transform_6, window_bounds = array<i64: 1, 128>}, {pipeline_mode = #tpu.pipeline_mode<synchronous>, transform_indices = @transform_7, window_bounds = array<i64: 128, 4>}, {pipeline_mode = #tpu.pipeline_mode<synchronous>, transform_indices = @transform_8, window_bounds = array<i64: 1, 4>}, {transform_indices = @transform_9, window_bounds = array<i64: 8, 4>}]} {
    %c0 = arith.constant 0 : index
    %c0_0 = arith.constant 0 : index
    %0 = vector.load %arg1[%c0, %c0_0] : memref<8x20xf32, #tpu.memory_space<vmem>>, vector<8x20xf32>
    %c0_1 = arith.constant 0 : index
    %c0_2 = arith.constant 0 : index
    %1 = vector.load %arg2[%c0_1, %c0_2] : memref<20x128xf32, #tpu.memory_space<vmem>>, vector<20x128xf32>
    %cst = arith.constant dense<0.000000e+00> : vector<8x128xf32>
    %2 = tpu.matmul %0, %1, %cst {dimension_numbers = #tpu.dot_dimension_numbers<[1], [0], [0], [1], [0, 0, 1, 1], [], []>} : vector<8x20xf32>, vector<20x128xf32>, vector<8x128xf32> -> vector<8x128xf32>
    %c0_3 = arith.constant 0 : index
    %c0_4 = arith.constant 0 : index
    %3 = vector.load %arg3[%c0_3, %c0_4] : memref<1x128xf32, #tpu.memory_space<vmem>>, vector<1x128xf32>
    %4 = vector.broadcast %3 : vector<1x128xf32> to vector<8x128xf32>
    %5 = arith.addf %2, %4 : vector<8x128xf32>
    %cst_5 = arith.constant 0.000000e+00 : f32
    %6 = vector.broadcast %cst_5 : f32 to vector<8x128xf32>
    %7 = arith.cmpf oge, %5, %6 : vector<8x128xf32>
    %cst_6 = arith.constant 0.00999999977 : f32
    %8 = vector.broadcast %cst_6 : f32 to vector<8x128xf32>
    %9 = arith.mulf %8, %5 : vector<8x128xf32>
    %10 = arith.select %7, %5, %9 : vector<8x128xi1>, vector<8x128xf32>
    %c0_7 = arith.constant 0 : index
    %c0_8 = arith.constant 0 : index
    %11 = vector.load %arg4[%c0_7, %c0_8] : memref<128x128xf32, #tpu.memory_space<vmem>>, vector<128x128xf32>
    %cst_9 = arith.constant dense<0.000000e+00> : vector<8x128xf32>
    %12 = tpu.matmul %10, %11, %cst_9 {dimension_numbers = #tpu.dot_dimension_numbers<[1], [0], [0], [1], [0, 0, 1, 1], [], []>} : vector<8x128xf32>, vector<128x128xf32>, vector<8x128xf32> -> vector<8x128xf32>
    %c0_10 = arith.constant 0 : index
    %c0_11 = arith.constant 0 : index
    %13 = vector.load %arg5[%c0_10, %c0_11] : memref<1x128xf32, #tpu.memory_space<vmem>>, vector<1x128xf32>
    %14 = vector.broadcast %13 : vector<1x128xf32> to vector<8x128xf32>
    %15 = arith.addf %12, %14 : vector<8x128xf32>
    %cst_12 = arith.constant 0.000000e+00 : f32
    %16 = vector.broadcast %cst_12 : f32 to vector<8x128xf32>
    %17 = arith.cmpf oge, %15, %16 : vector<8x128xf32>
    %cst_13 = arith.constant 0.00999999977 : f32
    %18 = vector.broadcast %cst_13 : f32 to vector<8x128xf32>
    %19 = arith.mulf %18, %15 : vector<8x128xf32>
    %20 = arith.select %17, %15, %19 : vector<8x128xi1>, vector<8x128xf32>
    %c0_14 = arith.constant 0 : index
    %c0_15 = arith.constant 0 : index
    %21 = vector.load %arg6[%c0_14, %c0_15] : memref<128x128xf32, #tpu.memory_space<vmem>>, vector<128x128xf32>
    %cst_16 = arith.constant dense<0.000000e+00> : vector<8x128xf32>
    %22 = tpu.matmul %20, %21, %cst_16 {dimension_numbers = #tpu.dot_dimension_numbers<[1], [0], [0], [1], [0, 0, 1, 1], [], []>} : vector<8x128xf32>, vector<128x128xf32>, vector<8x128xf32> -> vector<8x128xf32>
    %c0_17 = arith.constant 0 : index
    %c0_18 = arith.constant 0 : index
    %23 = vector.load %arg7[%c0_17, %c0_18] : memref<1x128xf32, #tpu.memory_space<vmem>>, vector<1x128xf32>
    %24 = vector.broadcast %23 : vector<1x128xf32> to vector<8x128xf32>
    %25 = arith.addf %22, %24 : vector<8x128xf32>
    %cst_19 = arith.constant 0.000000e+00 : f32
    %26 = vector.broadcast %cst_19 : f32 to vector<8x128xf32>
    %27 = arith.cmpf oge, %25, %26 : vector<8x128xf32>
    %cst_20 = arith.constant 0.00999999977 : f32
    %28 = vector.broadcast %cst_20 : f32 to vector<8x128xf32>
    %29 = arith.mulf %28, %25 : vector<8x128xf32>
    %30 = arith.select %27, %25, %29 : vector<8x128xi1>, vector<8x128xf32>
    %c0_21 = arith.constant 0 : index
    %c0_22 = arith.constant 0 : index
    %31 = vector.load %arg8[%c0_21, %c0_22] : memref<128x4xf32, #tpu.memory_space<vmem>>, vector<128x4xf32>
    %cst_23 = arith.constant dense<0.000000e+00> : vector<8x4xf32>
    %32 = tpu.matmul %30, %31, %cst_23 {dimension_numbers = #tpu.dot_dimension_numbers<[1], [0], [0], [1], [0, 0, 1, 1], [], []>} : vector<8x128xf32>, vector<128x4xf32>, vector<8x4xf32> -> vector<8x4xf32>
    %c0_24 = arith.constant 0 : index
    %c0_25 = arith.constant 0 : index
    %33 = vector.load %arg9[%c0_24, %c0_25] : memref<1x4xf32, #tpu.memory_space<vmem>>, vector<1x4xf32>
    %34 = vector.broadcast %33 : vector<1x4xf32> to vector<8x4xf32>
    %35 = arith.addf %32, %34 : vector<8x4xf32>
    %c0_26 = arith.constant 0 : index
    %c0_27 = arith.constant 0 : index
    %36 = vector.load %arg10[%c0_26, %c0_27] : memref<8x4xf32, #tpu.memory_space<vmem>>, vector<8x4xf32>
    tpu.vector_store %arg10[%c0_26, %c0_27], %35 {strides = array<i32>} : memref<8x4xf32, #tpu.memory_space<vmem>>, vector<8x4xf32>,
    return
  }
  func.func @transform_0(%arg0: i32) -> (i32, i32) {
    %c0_i32 = arith.constant 0 : i32
    %c0_i32_0 = arith.constant 0 : i32
    return %arg0, %c0_i32 : i32, i32
  }
  func.func @transform_1(%arg0: i32) -> (i32, i32) {
    %c0_i32 = arith.constant 0 : i32
    %c0_i32_0 = arith.constant 0 : i32
    %c0_i32_1 = arith.constant 0 : i32
    return %c0_i32, %c0_i32_0 : i32, i32
  }
  func.func @transform_2(%arg0: i32) -> (i32, i32) {
    %c0_i32 = arith.constant 0 : i32
    %c0_i32_0 = arith.constant 0 : i32
    %c0_i32_1 = arith.constant 0 : i32
    return %c0_i32, %c0_i32_0 : i32, i32
  }
  func.func @transform_3(%arg0: i32) -> (i32, i32) {
    %c0_i32 = arith.constant 0 : i32
    %c0_i32_0 = arith.constant 0 : i32
    %c0_i32_1 = arith.constant 0 : i32
    return %c0_i32, %c0_i32_0 : i32, i32
  }
  func.func @transform_4(%arg0: i32) -> (i32, i32) {
    %c0_i32 = arith.constant 0 : i32
    %c0_i32_0 = arith.constant 0 : i32
    %c0_i32_1 = arith.constant 0 : i32
    return %c0_i32, %c0_i32_0 : i32, i32
  }
  func.func @transform_5(%arg0: i32) -> (i32, i32) {
    %c0_i32 = arith.constant 0 : i32
    %c0_i32_0 = arith.constant 0 : i32
    %c0_i32_1 = arith.constant 0 : i32
    return %c0_i32, %c0_i32_0 : i32, i32
  }
  func.func @transform_6(%arg0: i32) -> (i32, i32) {
    %c0_i32 = arith.constant 0 : i32
    %c0_i32_0 = arith.constant 0 : i32
    %c0_i32_1 = arith.constant 0 : i32
    return %c0_i32, %c0_i32_0 : i32, i32
  }
  func.func @transform_7(%arg0: i32) -> (i32, i32) {
    %c0_i32 = arith.constant 0 : i32
    %c0_i32_0 = arith.constant 0 : i32
    %c0_i32_1 = arith.constant 0 : i32
    return %c0_i32, %c0_i32_0 : i32, i32
  }
  func.func @transform_8(%arg0: i32) -> (i32, i32) {
    %c0_i32 = arith.constant 0 : i32
    %c0_i32_0 = arith.constant 0 : i32
    %c0_i32_1 = arith.constant 0 : i32
    return %c0_i32, %c0_i32_0 : i32, i32
  }
  func.func @transform_9(%arg0: i32) -> (i32, i32) {
    %c0_i32 = arith.constant 0 : i32
    %c0_i32_0 = arith.constant 0 : i32
    return %arg0, %c0_i32 : i32, i32
  }
}

</mosaic_0001>

<llo_original>
// kernel: tpu_custom_call.1
$region0: #{tpu_custom_call.1}
  #allocation0 [shape = 'u32[]', space=smem, size = 0x4, offset = 0x4, fixed_abs, tag = 'smem constant byte address 0x4 - core index']
  #allocation1 [shape = 'u32[144,128]{1,0:T(1,128)}', space=vmem, size = 0x12000, scoped, tag = 'internal scratch']
  %s0 = inlined_call_operand.vmem [shape: f32[8,20], index: 0, kind: input, shape index: {}]
  %s1 = inlined_call_operand.hbm [shape: f32[20,128], index: 1, kind: input, shape index: {}]
  %s2 = inlined_call_operand.vmem [shape: f32[1,128], index: 2, kind: input, shape index: {}]
  %s3 = inlined_call_operand.vmem [shape: f32[128,128], index: 3, kind: input, shape index: {}]
  %s4 = inlined_call_operand.vmem [shape: f32[1,128], index: 4, kind: input, shape index: {}]
  %s5 = inlined_call_operand.hbm [shape: f32[128,128], index: 5, kind: input, shape index: {}]
  %s6 = inlined_call_operand.vmem [shape: f32[1,128], index: 6, kind: input, shape index: {}]
  %s7 = inlined_call_operand.vmem [shape: f32[128,4], index: 7, kind: input, shape index: {}]
  %s8 = inlined_call_operand.vmem [shape: f32[1,4], index: 8, kind: input, shape index: {}]
  %s9 = inlined_call_operand.vmem [shape: f32[8,4], index: 9, kind: output, shape index: {}]
  %s10 = sld [smem:[#allocation0]]
  $region54: #{tpu_custom_call.1} parent=0
    _
  %s12 = ssub.s32 1, %s10
  %s13 = scalar_select 0, %s12, %s10
  $region1: #{tpu_custom_call.1} parent=0
    #allocation2 [shape = 'u8[12288]{0}', space=vmem, size = 0x3000, scoped, tag = 'input window, operand 1, single buffered']
    #allocation3 [shape = 's32[1]{0}', space=sflag, size = 0x4, scoped, tag = 'scoped memory for tpu_custom_call.1']
    #allocation4 [shape = 'u8[65536]{0}', space=vmem, size = 0x10000, scoped, tag = 'input window, operand 5, single buffered']
    #allocation5 [shape = 's32[1]{0}', space=sflag, size = 0x4, scoped, tag = 'scoped memory for tpu_custom_call.1']
    %14 = vsyncpa [#allocation3], 0
    %15 = vsyncpa [#allocation5], 0
    // Predicated region
    $region2: #{tpu_custom_call.1} parent=1 // pred_check
      _
    $region3: #{tpu_custom_call.1} parent=1 // pred_check_branch
      %17 = sbr.rel (0) target = $region5
    $region4: #{tpu_custom_call.1} parent=1 // pred_region
      _
    $region5: #{tpu_custom_call.1} parent=1 // pred_fallthru
      _
    // Predicated region
    $region6: #{tpu_custom_call.1} parent=1 // pred_check
      _
    $region7: #{tpu_custom_call.1} parent=1 // pred_check_branch
      %19 = sbr.rel (0) target = $region9
    $region8: #{tpu_custom_call.1} parent=1 // pred_region
      %s21 = ssub.s32 384, 384
      %22 = vsyncadd [#allocation3], %s21
      %s23 = sshll.u32 [#allocation2], 4
      %s24 = int_to_ptr.vmem [resolvable:$true] %s23
      %29 = dma.hbm_to_vmem [thread:$0]  %s1, 384, %s24, [#allocation3], 128, 128, 8
    $region9: #{tpu_custom_call.1} parent=1 // pred_fallthru
      _
    // Predicated region
    $region10: #{tpu_custom_call.1} parent=1 // pred_check
      _
    $region11: #{tpu_custom_call.1} parent=1 // pred_check_branch
      %31 = sbr.rel (0) target = $region13
    $region12: #{tpu_custom_call.1} parent=1 // pred_region
      _
    $region13: #{tpu_custom_call.1} parent=1 // pred_fallthru
      _
    // Predicated region
    $region14: #{tpu_custom_call.1} parent=1 // pred_check
      _
    $region15: #{tpu_custom_call.1} parent=1 // pred_check_branch
      %33 = sbr.rel (0) target = $region17
    $region16: #{tpu_custom_call.1} parent=1 // pred_region
      _
    $region17: #{tpu_custom_call.1} parent=1 // pred_fallthru
      _
    // Predicated region
    $region18: #{tpu_custom_call.1} parent=1 // pred_check
      _
    $region19: #{tpu_custom_call.1} parent=1 // pred_check_branch
      %35 = sbr.rel (0) target = $region21
    $region20: #{tpu_custom_call.1} parent=1 // pred_region
      _
    $region21: #{tpu_custom_call.1} parent=1 // pred_fallthru
      _
    // Predicated region
    $region22: #{tpu_custom_call.1} parent=1 // pred_check
      _
    $region23: #{tpu_custom_call.1} parent=1 // pred_check_branch
      %37 = sbr.rel (0) target = $region25
    $region24: #{tpu_custom_call.1} parent=1 // pred_region
      %s39 = ssub.s32 2048, 2048
      %40 = vsyncadd [#allocation5], %s39
      %s41 = sshll.u32 [#allocation4], 4
      %s42 = int_to_ptr.vmem [resolvable:$true] %s41
      %47 = dma.hbm_to_vmem [thread:$0]  %s5, 2048, %s42, [#allocation5], 128, 128, 8
    $region25: #{tpu_custom_call.1} parent=1 // pred_fallthru
      _
    // Predicated region
    $region26: #{tpu_custom_call.1} parent=1 // pred_check
      _
    $region27: #{tpu_custom_call.1} parent=1 // pred_check_branch
      %49 = sbr.rel (0) target = $region29
    $region28: #{tpu_custom_call.1} parent=1 // pred_region
      _
    $region29: #{tpu_custom_call.1} parent=1 // pred_fallthru
      _
    // Predicated region
    $region30: #{tpu_custom_call.1} parent=1 // pred_check
      _
    $region31: #{tpu_custom_call.1} parent=1 // pred_check_branch
      %51 = sbr.rel (0) target = $region33
    $region32: #{tpu_custom_call.1} parent=1 // pred_region
      _
    $region33: #{tpu_custom_call.1} parent=1 // pred_fallthru
      _
    // Predicated region
    $region34: #{tpu_custom_call.1} parent=1 // pred_check
      _
    $region35: #{tpu_custom_call.1} parent=1 // pred_check_branch
      %53 = sbr.rel (0) target = $region37
    $region36: #{tpu_custom_call.1} parent=1 // pred_region
      _
    $region37: #{tpu_custom_call.1} parent=1 // pred_fallthru
      _
    // Predicated region
    $region38: #{tpu_custom_call.1} parent=1 // pred_check
      _
    $region39: #{tpu_custom_call.1} parent=1 // pred_check_branch
      %55 = sbr.rel (0) target = $region41
    $region40: #{tpu_custom_call.1} parent=1 // pred_region
      %56 = dma.done [#allocation3], 384
    $region41: #{tpu_custom_call.1} parent=1 // pred_fallthru
      _
    // Predicated region
    $region42: #{tpu_custom_call.1} parent=1 // pred_check
      _
    $region43: #{tpu_custom_call.1} parent=1 // pred_check_branch
      %58 = sbr.rel (0) target = $region45
    $region44: #{tpu_custom_call.1} parent=1 // pred_region
      %59 = dma.done [#allocation5], 2048
    $region45: #{tpu_custom_call.1} parent=1 // pred_fallthru
      _
    %v60 = vld [vmem:[%s0] sm:$0xff]
    %v61 = vld [vmem:[#allocation2] sm:$0xff]
    %v62 = vld [vmem:[#allocation2 + $0x8] sm:$0xff]
    %v63 = vld [vmem:[#allocation2 + $0x10] sm:$0xf]
    %v64 = vld [vmem:[%s2] sm:$0x1]
    %v66 = vlaneseq
    %v67 = vshrl.u32 %v66, 7
    %v68 = vsub.s32 0, %v67
    %v69 = vrot.slane %v64, %v68
    %vm71 = vcmask 162816
    %v73 = vsel %vm71, %v60, 0
    %vm75 = vcmask 1043456
    %v77 = vsel %vm75, %v63, 0
    %79 = vmatprep.subr.mxu0 0.0
    %80 = vmatpush1.msra.mxu0 %v61
    %81 = vmatprep.subr.mxu0 0.0
    %82 = vmatpush1.msra.mxu0 %v62
    %83 = vmatprep.subr.mxu0 0.0
    %84 = vmatpush1.msra.mxu0 %v77
    %85 = vmatprep.subr.mxu0 0.0
    %86 = vmatpush1.msra.mxu0 0.0
    %87 = vmatprep.subr.mxu0 0.0
    %88 = vmatpush1.msra.mxu0 0.0
    %89 = vmatprep.subr.mxu0 0.0
    %90 = vmatpush1.msra.mxu0 0.0
    %91 = vmatprep.subr.mxu0 0.0
    %92 = vmatpush1.msra.mxu0 0.0
    %93 = vmatprep.subr.mxu0 0.0
    %94 = vmatpush1.msra.mxu0 0.0
    %95 = vmatprep.subr.mxu0 0.0
    %96 = vmatpush1.msra.mxu0 0.0
    %97 = vmatprep.subr.mxu0 0.0
    %98 = vmatpush1.msra.mxu0 0.0
    %99 = vmatprep.subr.mxu0 0.0
    %100 = vmatpush1.msra.mxu0 0.0
    %101 = vmatprep.subr.mxu0 0.0
    %102 = vmatpush1.msra.mxu0 0.0
    %103 = vmatprep.subr.mxu0 0.0
    %104 = vmatpush1.msra.mxu0 0.0
    %105 = vmatprep.subr.mxu0 0.0
    %106 = vmatpush1.msra.mxu0 0.0
    %107 = vmatprep.subr.mxu0 0.0
    %108 = vmatpush1.msra.mxu0 0.0
    %109 = vmatprep.subr.mxu0 0.0
    %110 = vmatpush1.msra.mxu0 0.0
    %111 = vmatprep.subr.mxu0 0.0
    %112 = vmatpush1.msra.mxu0 0.0
    %113 = vmatprep.subr.mxu0 0.0
    %114 = vmatpush1.msra.mxu0 0.0
    %115 = vmatprep.subr.mxu0 0.0
    %116 = vmatpush1.msra.mxu0 0.0
    %117 = vmatprep.subr.mxu0 0.0
    %118 = vmatpush1.msra.mxu0 0.0
    %119 = vmatprep.subr.mxu0 0.0
    %120 = vmatpush1.msra.mxu0 0.0
    %121 = vmatprep.subr.mxu0 0.0
    %122 = vmatpush1.msra.mxu0 0.0
    %123 = vmatprep.subr.mxu0 0.0
    %124 = vmatpush1.msra.mxu0 0.0
    %125 = vmatprep.subr.mxu0 0.0
    %126 = vmatpush1.msra.mxu0 0.0
    %127 = vmatprep.subr.mxu0 0.0
    %128 = vmatpush1.msra.mxu0 0.0
    %129 = vmatprep.subr.mxu0 0.0
    %130 = vmatpush1.msra.mxu0 0.0
    %131 = vmatprep.subr.mxu0 0.0
    %132 = vmatpush1.msra.mxu0 0.0
    %133 = vmatprep.subr.mxu0 0.0
    %134 = vmatpush1.msra.mxu0 0.0
    %135 = vmatprep.subr.mxu0 0.0
    %136 = vmatpush1.msra.mxu0 0.0
    %137 = vmatprep.subr.mxu0 0.0
    %138 = vmatpush1.msra.mxu0 0.0
    %139 = vmatprep.subr.mxu0 0.0
    %140 = vmatpush1.msra.mxu0 0.0
    %141 = vmatprep.subr.mxu0 0.0
    %142 = vmatpush1.msra.mxu0 0.0
    %143 = vmatprep.mubr.f32.mxu0 0.0
    %144 = vmatmul.mubr.f32.gmra.mrb[0].mxu0 %v73
    %v145 = vpop.f32.mrb[0].mxu0
    %v146 = vadd.f32 %v69, %v145
    %v147 = vpop.f32.mrb[0].mxu0
    %148 = vdwg.mxu0
    %vm149 = vcmp.ge.f32.partialorder %v146, 0.0
    %v150 = vmul.f32 %v146, 0.01
    %v151 = vsel %vm149, %v146, %v150
    %v152 = vld [vmem:[%s3] sm:$0xff]
    %v153 = vld [vmem:[%s3 + $0x8] sm:$0xff]
    %v154 = vld [vmem:[%s3 + $0x10] sm:$0xff]
    %v155 = vld [vmem:[%s3 + $0x18] sm:$0xff]
    %v156 = vld [vmem:[%s3 + $0x20] sm:$0xff]
    %v157 = vld [vmem:[%s3 + $0x28] sm:$0xff]
    %v158 = vld [vmem:[%s3 + $0x30] sm:$0xff]
    %v159 = vld [vmem:[%s3 + $0x38] sm:$0xff]
    %v160 = vld [vmem:[%s3 + $0x40] sm:$0xff]
    %v161 = vld [vmem:[%s3 + $0x48] sm:$0xff]
    %v162 = vld [vmem:[%s3 + $0x50] sm:$0xff]
    %v163 = vld [vmem:[%s3 + $0x58] sm:$0xff]
    %v164 = vld [vmem:[%s3 + $0x60] sm:$0xff]
    %v165 = vld [vmem:[%s3 + $0x68] sm:$0xff]
    %v166 = vld [vmem:[%s3 + $0x70] sm:$0xff]
    %v167 = vld [vmem:[%s3 + $0x78] sm:$0xff]
    %v168 = vld [vmem:[%s4] sm:$0x1]
    %v170 = vlaneseq
    %v171 = vshrl.u32 %v170, 7
    %v172 = vsub.s32 0, %v171
    %v173 = vrot.slane %v168, %v172
    %175 = vmatprep.subr.mxu0 0.0
    %176 = vmatpush1.msra.mxu0 %v152
    %177 = vmatprep.subr.mxu0 0.0
    %178 = vmatpush1.msra.mxu0 %v153
    %179 = vmatprep.subr.mxu0 0.0
    %180 = vmatpush1.msra.mxu0 %v154
    %181 = vmatprep.subr.mxu0 0.0
    %182 = vmatpush1.msra.mxu0 %v155
    %183 = vmatprep.subr.mxu0 0.0
    %184 = vmatpush1.msra.mxu0 %v156
    %185 = vmatprep.subr.mxu0 0.0
    %186 = vmatpush1.msra.mxu0 %v157
    %187 = vmatprep.subr.mxu0 0.0
    %188 = vmatpush1.msra.mxu0 %v158
    %189 = vmatprep.subr.mxu0 0.0
    %190 = vmatpush1.msra.mxu0 %v159
    %191 = vmatprep.subr.mxu0 0.0
    %192 = vmatpush1.msra.mxu0 %v160
    %193 = vmatprep.subr.mxu0 0.0
    %194 = vmatpush1.msra.mxu0 %v161
    %195 = vmatprep.subr.mxu0 0.0
    %196 = vmatpush1.msra.mxu0 %v162
    %197 = vmatprep.subr.mxu0 0.0
    %198 = vmatpush1.msra.mxu0 %v163
    %199 = vmatprep.subr.mxu0 0.0
    %200 = vmatpush1.msra.mxu0 %v164
    %201 = vmatprep.subr.mxu0 0.0
    %202 = vmatpush1.msra.mxu0 %v165
    %203 = vmatprep.subr.mxu0 0.0
    %204 = vmatpush1.msra.mxu0 %v166
    %205 = vmatprep.subr.mxu0 0.0
    %206 = vmatpush1.msra.mxu0 %v167
    %207 = vmatprep.subr.mxu0 0.0
    %208 = vmatpush1.msra.mxu0 0.0
    %209 = vmatprep.subr.mxu0 0.0
    %210 = vmatpush1.msra.mxu0 0.0
    %211 = vmatprep.subr.mxu0 0.0
    %212 = vmatpush1.msra.mxu0 0.0
    %213 = vmatprep.subr.mxu0 0.0
    %214 = vmatpush1.msra.mxu0 0.0
    %215 = vmatprep.subr.mxu0 0.0
    %216 = vmatpush1.msra.mxu0 0.0
    %217 = vmatprep.subr.mxu0 0.0
    %218 = vmatpush1.msra.mxu0 0.0
    %219 = vmatprep.subr.mxu0 0.0
    %220 = vmatpush1.msra.mxu0 0.0
    %221 = vmatprep.subr.mxu0 0.0
    %222 = vmatpush1.msra.mxu0 0.0
    %223 = vmatprep.subr.mxu0 0.0
    %224 = vmatpush1.msra.mxu0 0.0
    %225 = vmatprep.subr.mxu0 0.0
    %226 = vmatpush1.msra.mxu0 0.0
    %227 = vmatprep.subr.mxu0 0.0
    %228 = vmatpush1.msra.mxu0 0.0
    %229 = vmatprep.subr.mxu0 0.0
    %230 = vmatpush1.msra.mxu0 0.0
    %231 = vmatprep.subr.mxu0 0.0
    %232 = vmatpush1.msra.mxu0 0.0
    %233 = vmatprep.subr.mxu0 0.0
    %234 = vmatpush1.msra.mxu0 0.0
    %235 = vmatprep.subr.mxu0 0.0
    %236 = vmatpush1.msra.mxu0 0.0
    %237 = vmatprep.subr.mxu0 0.0
    %238 = vmatpush1.msra.mxu0 0.0
    %239 = vmatprep.mubr.f32.mxu0 0.0
    %240 = vmatmul.mubr.f32.gmra.mrb[0].mxu0 %v151
    %v241 = vpop.f32.mrb[0].mxu0
    %v242 = vadd.f32 %v173, %v241
    %v243 = vpop.f32.mrb[0].mxu0
    %244 = vdwg.mxu0
    %vm245 = vcmp.ge.f32.partialorder %v242, 0.0
    %v246 = vmul.f32 %v242, 0.01
    %v247 = vsel %vm245, %v242, %v246
    %v248 = vld [vmem:[#allocation4] sm:$0xff]
    %v249 = vld [vmem:[#allocation4 + $0x8] sm:$0xff]
    %v250 = vld [vmem:[#allocation4 + $0x10] sm:$0xff]
    %v251 = vld [vmem:[#allocation4 + $0x18] sm:$0xff]
    %v252 = vld [vmem:[#allocation4 + $0x20] sm:$0xff]
    %v253 = vld [vmem:[#allocation4 + $0x28] sm:$0xff]
    %v254 = vld [vmem:[#allocation4 + $0x30] sm:$0xff]
    %v255 = vld [vmem:[#allocation4 + $0x38] sm:$0xff]
    %v256 = vld [vmem:[#allocation4 + $0x40] sm:$0xff]
    %v257 = vld [vmem:[#allocation4 + $0x48] sm:$0xff]
    %v258 = vld [vmem:[#allocation4 + $0x50] sm:$0xff]
    %v259 = vld [vmem:[#allocation4 + $0x58] sm:$0xff]
    %v260 = vld [vmem:[#allocation4 + $0x60] sm:$0xff]
    %v261 = vld [vmem:[#allocation4 + $0x68] sm:$0xff]
    %v262 = vld [vmem:[#allocation4 + $0x70] sm:$0xff]
    %v263 = vld [vmem:[#allocation4 + $0x78] sm:$0xff]
    %v264 = vld [vmem:[%s6] sm:$0x1]
    %v266 = vlaneseq
    %v267 = vshrl.u32 %v266, 7
    %v268 = vsub.s32 0, %v267
    %v269 = vrot.slane %v264, %v268
    %271 = vmatprep.subr.mxu0 0.0
    %272 = vmatpush1.msra.mxu0 %v248
    %273 = vmatprep.subr.mxu0 0.0
    %274 = vmatpush1.msra.mxu0 %v249
    %275 = vmatprep.subr.mxu0 0.0
    %276 = vmatpush1.msra.mxu0 %v250
    %277 = vmatprep.subr.mxu0 0.0
    %278 = vmatpush1.msra.mxu0 %v251
    %279 = vmatprep.subr.mxu0 0.0
    %280 = vmatpush1.msra.mxu0 %v252
    %281 = vmatprep.subr.mxu0 0.0
    %282 = vmatpush1.msra.mxu0 %v253
    %283 = vmatprep.subr.mxu0 0.0
    %284 = vmatpush1.msra.mxu0 %v254
    %285 = vmatprep.subr.mxu0 0.0
    %286 = vmatpush1.msra.mxu0 %v255
    %287 = vmatprep.subr.mxu0 0.0
    %288 = vmatpush1.msra.mxu0 %v256
    %289 = vmatprep.subr.mxu0 0.0
    %290 = vmatpush1.msra.mxu0 %v257
    %291 = vmatprep.subr.mxu0 0.0
    %292 = vmatpush1.msra.mxu0 %v258
    %293 = vmatprep.subr.mxu0 0.0
    %294 = vmatpush1.msra.mxu0 %v259
    %295 = vmatprep.subr.mxu0 0.0
    %296 = vmatpush1.msra.mxu0 %v260
    %297 = vmatprep.subr.mxu0 0.0
    %298 = vmatpush1.msra.mxu0 %v261
    %299 = vmatprep.subr.mxu0 0.0
    %300 = vmatpush1.msra.mxu0 %v262
    %301 = vmatprep.subr.mxu0 0.0
    %302 = vmatpush1.msra.mxu0 %v263
    %303 = vmatprep.subr.mxu0 0.0
    %304 = vmatpush1.msra.mxu0 0.0
    %305 = vmatprep.subr.mxu0 0.0
    %306 = vmatpush1.msra.mxu0 0.0
    %307 = vmatprep.subr.mxu0 0.0
    %308 = vmatpush1.msra.mxu0 0.0
    %309 = vmatprep.subr.mxu0 0.0
    %310 = vmatpush1.msra.mxu0 0.0
    %311 = vmatprep.subr.mxu0 0.0
    %312 = vmatpush1.msra.mxu0 0.0
    %313 = vmatprep.subr.mxu0 0.0
    %314 = vmatpush1.msra.mxu0 0.0
    %315 = vmatprep.subr.mxu0 0.0
    %316 = vmatpush1.msra.mxu0 0.0
    %317 = vmatprep.subr.mxu0 0.0
    %318 = vmatpush1.msra.mxu0 0.0
    %319 = vmatprep.subr.mxu0 0.0
    %320 = vmatpush1.msra.mxu0 0.0
    %321 = vmatprep.subr.mxu0 0.0
    %322 = vmatpush1.msra.mxu0 0.0
    %323 = vmatprep.subr.mxu0 0.0
    %324 = vmatpush1.msra.mxu0 0.0
    %325 = vmatprep.subr.mxu0 0.0
    %326 = vmatpush1.msra.mxu0 0.0
    %327 = vmatprep.subr.mxu0 0.0
    %328 = vmatpush1.msra.mxu0 0.0
    %329 = vmatprep.subr.mxu0 0.0
    %330 = vmatpush1.msra.mxu0 0.0
    %331 = vmatprep.subr.mxu0 0.0
    %332 = vmatpush1.msra.mxu0 0.0
    %333 = vmatprep.subr.mxu0 0.0
    %334 = vmatpush1.msra.mxu0 0.0
    %335 = vmatprep.mubr.f32.mxu0 0.0
    %336 = vmatmul.mubr.f32.gmra.mrb[0].mxu0 %v247
    %v337 = vpop.f32.mrb[0].mxu0
    %v338 = vadd.f32 %v269, %v337
    %v339 = vpop.f32.mrb[0].mxu0
    %340 = vdwg.mxu0
    %vm341 = vcmp.ge.f32.partialorder %v338, 0.0
    %v342 = vmul.f32 %v338, 0.01
    %v343 = vsel %vm341, %v338, %v342
    %v344 = vld [vmem:[%s7] sm:$0xff]
    %v345 = vld [vmem:[%s7 + $0x8] sm:$0xff]
    %v346 = vld [vmem:[%s7 + $0x10] sm:$0xff]
    %v347 = vld [vmem:[%s7 + $0x18] sm:$0xff]
    %v348 = vld [vmem:[%s7 + $0x20] sm:$0xff]
    %v349 = vld [vmem:[%s7 + $0x28] sm:$0xff]
    %v350 = vld [vmem:[%s7 + $0x30] sm:$0xff]
    %v351 = vld [vmem:[%s7 + $0x38] sm:$0xff]
    %v352 = vld [vmem:[%s7 + $0x40] sm:$0xff]
    %v353 = vld [vmem:[%s7 + $0x48] sm:$0xff]
    %v354 = vld [vmem:[%s7 + $0x50] sm:$0xff]
    %v355 = vld [vmem:[%s7 + $0x58] sm:$0xff]
    %v356 = vld [vmem:[%s7 + $0x60] sm:$0xff]
    %v357 = vld [vmem:[%s7 + $0x68] sm:$0xff]
    %v358 = vld [vmem:[%s7 + $0x70] sm:$0xff]
    %v359 = vld [vmem:[%s7 + $0x78] sm:$0xff]
    %v360 = vld [vmem:[%s8] sm:$0x1]
    %v362 = vlaneseq
    %v363 = vshrl.u32 %v362, 7
    %v364 = vsub.s32 0, %v363
    %v365 = vrot.slane %v360, %v364
    %367 = vmatprep.subr.mxu0 0.0
    %368 = vmatpush1.msra.mxu0 %v344
    %369 = vmatprep.subr.mxu0 0.0
    %370 = vmatpush1.msra.mxu0 %v345
    %371 = vmatprep.subr.mxu0 0.0
    %372 = vmatpush1.msra.mxu0 %v346
    %373 = vmatprep.subr.mxu0 0.0
    %374 = vmatpush1.msra.mxu0 %v347
    %375 = vmatprep.subr.mxu0 0.0
    %376 = vmatpush1.msra.mxu0 %v348
    %377 = vmatprep.subr.mxu0 0.0
    %378 = vmatpush1.msra.mxu0 %v349
    %379 = vmatprep.subr.mxu0 0.0
    %380 = vmatpush1.msra.mxu0 %v350
    %381 = vmatprep.subr.mxu0 0.0
    %382 = vmatpush1.msra.mxu0 %v351
    %383 = vmatprep.subr.mxu0 0.0
    %384 = vmatpush1.msra.mxu0 %v352
    %385 = vmatprep.subr.mxu0 0.0
    %386 = vmatpush1.msra.mxu0 %v353
    %387 = vmatprep.subr.mxu0 0.0
    %388 = vmatpush1.msra.mxu0 %v354
    %389 = vmatprep.subr.mxu0 0.0
    %390 = vmatpush1.msra.mxu0 %v355
    %391 = vmatprep.subr.mxu0 0.0
    %392 = vmatpush1.msra.mxu0 %v356
    %393 = vmatprep.subr.mxu0 0.0
    %394 = vmatpush1.msra.mxu0 %v357
    %395 = vmatprep.subr.mxu0 0.0
    %396 = vmatpush1.msra.mxu0 %v358
    %397 = vmatprep.subr.mxu0 0.0
    %398 = vmatpush1.msra.mxu0 %v359
    %399 = vmatprep.subr.mxu0 0.0
    %400 = vmatpush1.msra.mxu0 0.0
    %401 = vmatprep.subr.mxu0 0.0
    %402 = vmatpush1.msra.mxu0 0.0
    %403 = vmatprep.subr.mxu0 0.0
    %404 = vmatpush1.msra.mxu0 0.0
    %405 = vmatprep.subr.mxu0 0.0
    %406 = vmatpush1.msra.mxu0 0.0
    %407 = vmatprep.subr.mxu0 0.0
    %408 = vmatpush1.msra.mxu0 0.0
    %409 = vmatprep.subr.mxu0 0.0
    %410 = vmatpush1.msra.mxu0 0.0
    %411 = vmatprep.subr.mxu0 0.0
    %412 = vmatpush1.msra.mxu0 0.0
    %413 = vmatprep.subr.mxu0 0.0
    %414 = vmatpush1.msra.mxu0 0.0
    %415 = vmatprep.subr.mxu0 0.0
    %416 = vmatpush1.msra.mxu0 0.0
    %417 = vmatprep.subr.mxu0 0.0
    %418 = vmatpush1.msra.mxu0 0.0
    %419 = vmatprep.subr.mxu0 0.0
    %420 = vmatpush1.msra.mxu0 0.0
    %421 = vmatprep.subr.mxu0 0.0
    %422 = vmatpush1.msra.mxu0 0.0
    %423 = vmatprep.subr.mxu0 0.0
    %424 = vmatpush1.msra.mxu0 0.0
    %425 = vmatprep.subr.mxu0 0.0
    %426 = vmatpush1.msra.mxu0 0.0
    %427 = vmatprep.subr.mxu0 0.0
    %428 = vmatpush1.msra.mxu0 0.0
    %429 = vmatprep.subr.mxu0 0.0
    %430 = vmatpush1.msra.mxu0 0.0
    %431 = vmatprep.mubr.f32.mxu0 0.0
    %432 = vmatmul.mubr.f32.gmra.mrb[0].mxu0 %v343
    %v433 = vpop.f32.mrb[0].mxu0
    %v434 = vadd.f32 %v365, %v433
    %v435 = vpop.f32.mrb[0].mxu0
    %436 = vdwg.mxu0
    %vm437 = vcmask 31744
    %438 = vst.msk [vmem:[%s9] sm:$0xff] %vm437, %v434
    // Predicated region
    $region46: #{tpu_custom_call.1} parent=1 // pred_check
      _
    $region47: #{tpu_custom_call.1} parent=1 // pred_check_branch
      %440 = sbr.rel (0) target = $region49
    $region48: #{tpu_custom_call.1} parent=1 // pred_region
      _
    $region49: #{tpu_custom_call.1} parent=1 // pred_fallthru
      _
    // Predicated region
    $region50: #{tpu_custom_call.1} parent=1 // pred_check
      _
    $region51: #{tpu_custom_call.1} parent=1 // pred_check_branch
      %442 = sbr.rel (0) target = $region53
    $region52: #{tpu_custom_call.1} parent=1 // pred_region
      _
    $region53: #{tpu_custom_call.1} parent=1 // pred_fallthru
      _
    %443 = vsyncpa [#allocation3], 1
    %444 = vsyncpa [#allocation5], 1

</llo_original>
